<compile_context>
chip_gen: v7x
topology: tpu7x:2x2x1
jax: 0.10.0
libtpu: 0.0.40
codegen_flags: <defaults>
</compile_context>

<pallas_src>
import functools

import jax
import jax.numpy as jnp
from jax.experimental import pallas as pl
from jax.experimental.pallas import tpu as pltpu


def _round_up(x, m):
    return (x + m - 1) // m * m


def _bn_pad_kernel(x_ref, scale_ref, shift_ref, out_ref, *, pad, seq_len):
    # x_ref:     (R, L)       one row per (batch, channel) pair
    # scale_ref: (R, 1) f32   per-row scale = weight * rsqrt(var + eps)
    # shift_ref: (R, 1) f32   per-row shift = bias - mean * scale (== pad value)
    # out_ref:   (R, L + 2*pad)
    scale = scale_ref[...]
    shift = shift_ref[...]

    y = x_ref[...].astype(jnp.float32) * scale + shift           # (R, L) f32

    if pad > 0:
        r = x_ref.shape[0]
        pad_vals = jnp.broadcast_to(shift, (r, pad)).astype(out_ref.dtype)
        out_ref[:, pl.ds(0, pad)] = pad_vals                      # left stripe
        out_ref[:, pl.ds(pad + seq_len, pad)] = pad_vals          # right stripe
    out_ref[:, pl.ds(pad, seq_len)] = y.astype(out_ref.dtype)     # interior once


def bn_and_pad(x, weight, bias, running_mean, running_var,
               *, eps=1e-5, pad_pixels=2, affine=True):
    n, c, l = x.shape
    pad = int(pad_pixels)
    lp = l + 2 * pad

    # Fold BN affine + running stats once, in f32 (eps below bf16 resolution).
    inv_std = jax.lax.rsqrt(running_var.astype(jnp.float32) + jnp.float32(eps))
    if affine:
        scale = weight.astype(jnp.float32) * inv_std
        shift = bias.astype(jnp.float32) - running_mean.astype(jnp.float32) * scale
    else:
        scale = inv_std
        shift = -running_mean.astype(jnp.float32) * inv_std

    # Row-tiled view: (N*C, L) rows with per-row scale/shift (contiguous
    # reshape, no data movement).
    rows = n * c
    x2 = x.reshape(rows, l)
    scale_rows = jnp.broadcast_to(scale[None, :], (n, c)).reshape(rows, 1)
    shift_rows = jnp.broadcast_to(shift[None, :], (n, c)).reshape(rows, 1)

    itemsize = jnp.dtype(x.dtype).itemsize
    sublane = max(8, 32 // itemsize)      # 8 rows for f32, 16 for bf16, ...
    lane = 128
    l_pad = _round_up(l, lane)            # VMEM pads the last dim to 128 lanes
    lp_pad = _round_up(lp, lane)

    # Generation-aware VMEM budget (v7x has only 64 MiB physical VMEM; v5e/v6e
    # have 128 MiB). Budget covers the *total* double-buffered footprint.
    try:
        vmem_cap = int(pltpu.get_tpu_info().vmem_capacity_bytes)
    except Exception:
        vmem_cap = 64 * 1024 * 1024       # most conservative (v7x per-TC)
    budget_bytes = min(16 * 1024 * 1024, max(4 * 1024 * 1024, vmem_cap // 8))

    # Per-row VMEM bytes with lane-padded widths:
    #   2x (double-buffered) x / out blocks, 2x the (r,1)->(r,128)-padded
    #   scale+shift blocks, plus single-buffered in-kernel f32 temporaries.
    per_row_bytes = 2 * (l_pad * itemsize + lp_pad * itemsize + 2 * lane * 4)
    per_row_bytes += (l_pad + lp_pad) * 4
    r_budget = max(sublane, (budget_bytes // per_row_bytes) // sublane * sublane)

    rows_ceil = _round_up(rows, sublane)
    r = min(r_budget, rows_ceil)          # no artificial row cap
    # Prefer >= 2 grid steps so both v7x TensorCores get work (harmless on
    # single-TC v5e/v6e: one extra ~0.35us step at most).
    if rows_ceil > sublane:
        r = min(r, max(sublane, _round_up(-(-rows // 2), sublane)))
    r = max(sublane, r)

    grid = (pl.cdiv(rows, r),)            # partial edge block is masked

    kernel = functools.partial(_bn_pad_kernel, pad=pad, seq_len=int(l))

    out = pl.pallas_call(
        kernel,
        out_shape=jax.ShapeDtypeStruct((rows, lp), x.dtype),
        grid=grid,
        in_specs=[
            pl.BlockSpec((r, l), lambda i: (i, 0)),   # x rows
            pl.BlockSpec((r, 1), lambda i: (i, 0)),   # scale
            pl.BlockSpec((r, 1), lambda i: (i, 0)),   # shift
        ],
        out_specs=pl.BlockSpec((r, lp), lambda i: (i, 0)),
        compiler_params=pltpu.CompilerParams(
            dimension_semantics=("parallel",),
            vmem_limit_bytes=32 * 1024 * 1024),
    )(x2, scale_rows, shift_rows)

    return out.reshape(n, c, lp)


def _reference(x, weight, bias, running_mean, running_var, eps, pad):
    inv_std = 1.0 / jnp.sqrt(running_var + eps)
    scale = weight * inv_std
    shift = bias - running_mean * scale
    y = x * scale[None, :, None] + shift[None, :, None]
    if pad == 0:
        return y
    pad_vals = jnp.broadcast_to(
        shift[None, :, None], (x.shape[0], x.shape[1], pad))
    return jnp.concatenate([pad_vals, y, pad_vals], axis=-1)


if __name__ == "__main__":
    EPS = 1e-5
    key = jax.random.PRNGKey(0)

    def run_case(n, c, l, pad, k):
        kx, kw, kb, km, kv = jax.random.split(k, 5)
        x = jax.random.normal(kx, (n, c, l), dtype=jnp.float32)
        weight = 1.0 + 0.1 * jax.random.normal(kw, (c,), dtype=jnp.float32)
        bias = 0.1 * jax.random.normal(kb, (c,), dtype=jnp.float32)
        running_mean = 0.2 * jax.random.normal(km, (c,), dtype=jnp.float32)
        running_var = 1.0 + 0.1 * jax.random.uniform(kv, (c,), dtype=jnp.float32)

        out = bn_and_pad(x, weight, bias, running_mean, running_var,
                         eps=EPS, pad_pixels=pad)
        out = jax.block_until_ready(out)

        ref = _reference(x, weight, bias, running_mean, running_var, EPS, pad)
        assert out.shape == (n, c, l + 2 * pad), out.shape
        err = float(jnp.max(jnp.abs(out - ref)))
        assert jnp.allclose(out, ref, atol=1e-5, rtol=1e-5), err

    k1, k2 = jax.random.split(key)
    run_case(2, 4, 16, 2, k1)   # primary small shape (N, C, L) = (2, 4, 16)
    run_case(3, 5, 12, 3, k2)   # rows=15: exercises the masked partial edge block

    print("KERNEL_OK")
</pallas_src>

<mosaic_0001>
module attributes {stable_mosaic.version = 11 : i64} {
  func.func @_bn_pad_kernel(%arg0: i32, %arg1: memref<8x16xf32, #tpu.memory_space<vmem>>, %arg2: memref<8x1xf32, #tpu.memory_space<vmem>>, %arg3: memref<8x1xf32, #tpu.memory_space<vmem>>, %arg4: memref<8x20xf32, #tpu.memory_space<vmem>>) attributes {dimension_semantics = [#tpu.dimension_semantics<parallel>], iteration_bounds = array<i64: 1>, scalar_prefetch = 0 : i64, scratch_operands = 0 : i64, tpu.core_type = #tpu.core_type<tc>, window_params = [{transform_indices = @transform_0, window_bounds = array<i64: 8, 16>}, {transform_indices = @transform_1, window_bounds = array<i64: 8, 1>}, {transform_indices = @transform_2, window_bounds = array<i64: 8, 1>}, {transform_indices = @transform_3, window_bounds = array<i64: 8, 20>}]} {
    %c0 = arith.constant 0 : index
    %c0_0 = arith.constant 0 : index
    %0 = vector.load %arg2[%c0, %c0_0] : memref<8x1xf32, #tpu.memory_space<vmem>>, vector<8x1xf32>
    %c0_1 = arith.constant 0 : index
    %c0_2 = arith.constant 0 : index
    %1 = vector.load %arg3[%c0_1, %c0_2] : memref<8x1xf32, #tpu.memory_space<vmem>>, vector<8x1xf32>
    %c0_3 = arith.constant 0 : index
    %c0_4 = arith.constant 0 : index
    %2 = vector.load %arg1[%c0_3, %c0_4] : memref<8x16xf32, #tpu.memory_space<vmem>>, vector<8x16xf32>
    %3 = vector.broadcast %0 : vector<8x1xf32> to vector<8x16xf32>
    %4 = arith.mulf %2, %3 : vector<8x16xf32>
    %5 = vector.broadcast %1 : vector<8x1xf32> to vector<8x16xf32>
    %6 = arith.addf %4, %5 : vector<8x16xf32>
    %7 = vector.shape_cast %1 : vector<8x1xf32> to vector<8x1xf32>
    %8 = vector.broadcast %7 : vector<8x1xf32> to vector<8x2xf32>
    %c0_5 = arith.constant 0 : index
    %c0_6 = arith.constant 0 : index
    %9 = vector.load %arg4[%c0_5, %c0_6] : memref<8x20xf32, #tpu.memory_space<vmem>>, vector<8x2xf32>
    tpu.vector_store %arg4[%c0_5, %c0_6], %8 {strides = array<i32>} : memref<8x20xf32, #tpu.memory_space<vmem>>, vector<8x2xf32>,
    %c0_7 = arith.constant 0 : index
    %c18 = arith.constant 18 : index
    %10 = vector.load %arg4[%c0_7, %c18] : memref<8x20xf32, #tpu.memory_space<vmem>>, vector<8x2xf32>
    tpu.vector_store %arg4[%c0_7, %c18], %8 {strides = array<i32>} : memref<8x20xf32, #tpu.memory_space<vmem>>, vector<8x2xf32>,
    %c0_8 = arith.constant 0 : index
    %c2 = arith.constant 2 : index
    %11 = vector.load %arg4[%c0_8, %c2] : memref<8x20xf32, #tpu.memory_space<vmem>>, vector<8x16xf32>
    tpu.vector_store %arg4[%c0_8, %c2], %6 {strides = array<i32>} : memref<8x20xf32, #tpu.memory_space<vmem>>, vector<8x16xf32>,
    return
  }
  func.func @transform_0(%arg0: i32) -> (i32, i32) {
    %c0_i32 = arith.constant 0 : i32
    %c0_i32_0 = arith.constant 0 : i32
    return %arg0, %c0_i32 : i32, i32
  }
  func.func @transform_1(%arg0: i32) -> (i32, i32) {
    %c0_i32 = arith.constant 0 : i32
    %c0_i32_0 = arith.constant 0 : i32
    return %arg0, %c0_i32 : i32, i32
  }
  func.func @transform_2(%arg0: i32) -> (i32, i32) {
    %c0_i32 = arith.constant 0 : i32
    %c0_i32_0 = arith.constant 0 : i32
    return %arg0, %c0_i32 : i32, i32
  }
  func.func @transform_3(%arg0: i32) -> (i32, i32) {
    %c0_i32 = arith.constant 0 : i32
    %c0_i32_0 = arith.constant 0 : i32
    return %arg0, %c0_i32 : i32, i32
  }
}

</mosaic_0001>

<llo_original>
// kernel: tpu_custom_call.1
$region0: #{tpu_custom_call.1}
  #allocation0 [shape = 'u32[]', space=smem, size = 0x4, offset = 0x4, fixed_abs, tag = 'smem constant byte address 0x4 - core index']
  #allocation1 [shape = 'u32[144,128]{1,0:T(1,128)}', space=vmem, size = 0x12000, scoped, tag = 'internal scratch']
  %s0 = inlined_call_operand.vmem [shape: f32[8,16], index: 0, kind: input, shape index: {}]
  %s1 = inlined_call_operand.vmem [shape: f32[8,1], index: 1, kind: input, shape index: {}]
  %s2 = inlined_call_operand.vmem [shape: f32[8,1], index: 2, kind: input, shape index: {}]
  %s3 = inlined_call_operand.hbm [shape: f32[8,20], index: 3, kind: output, shape index: {}]
  %s4 = sld [smem:[#allocation0]]
  $region22: #{tpu_custom_call.1} parent=0
    _
  %s6 = ssub.s32 1, %s4
  %s7 = scalar_select 0, %s6, %s4
  $region1: #{tpu_custom_call.1} parent=0
    #allocation2 [shape = 'u8[4096]{0}', space=vmem, size = 0x1000, scoped, tag = 'output window, operand 0, single buffered']
    #allocation3 [shape = 's32[1]{0}', space=sflag, size = 0x4, scoped, tag = 'scoped memory for tpu_custom_call.1']
    %8 = vsyncpa [#allocation3], 0
    // Predicated region
    $region2: #{tpu_custom_call.1} parent=1 // pred_check
      _
    $region3: #{tpu_custom_call.1} parent=1 // pred_check_branch
      %10 = sbr.rel (0) target = $region5
    $region4: #{tpu_custom_call.1} parent=1 // pred_region
      _
    $region5: #{tpu_custom_call.1} parent=1 // pred_fallthru
      _
    // Predicated region
    $region6: #{tpu_custom_call.1} parent=1 // pred_check
      _
    $region7: #{tpu_custom_call.1} parent=1 // pred_check_branch
      %12 = sbr.rel (0) target = $region9
    $region8: #{tpu_custom_call.1} parent=1 // pred_region
      _
    $region9: #{tpu_custom_call.1} parent=1 // pred_fallthru
      _
    // Predicated region
    $region10: #{tpu_custom_call.1} parent=1 // pred_check
      _
    $region11: #{tpu_custom_call.1} parent=1 // pred_check_branch
      %14 = sbr.rel (0) target = $region13
    $region12: #{tpu_custom_call.1} parent=1 // pred_region
      _
    $region13: #{tpu_custom_call.1} parent=1 // pred_fallthru
      _
    %v15 = vld [vmem:[%s1] sm:$0xff]
    %v16 = vld [vmem:[%s2] sm:$0xff]
    %v17 = vld [vmem:[%s0] sm:$0xff]
    %19 = vset.pattern.permute.xlu0 0
    %20 = vperm.xlu0 %19, %v15
    %v21 = vpop.permute.xlu0 %20
    %v23 = vmul.f32 %v17, %v21
    %25 = vset.pattern.permute.xlu0 0
    %26 = vperm.xlu0 %25, %v16
    %v27 = vpop.permute.xlu0 %26
    %v29 = vadd.f32 %v23, %v27
    %vm30 = vcmask 15360
    %31 = vst.msk [vmem:[#allocation2] sm:$0xff] %vm30, %v27
    %vm32 = vcmask 162960
    %33 = vst.msk [vmem:[#allocation2] sm:$0xff] %vm32, %v27
    %35 = vrot.lane.b32.xlu0 %v29, 2
    %v36 = vpop.permute.xlu0 %35
    %vm38 = vcmask 146448
    %39 = vst.msk [vmem:[#allocation2] sm:$0xff] %vm38, %v36
    // Predicated region
    $region14: #{tpu_custom_call.1} parent=1 // pred_check
      _
    $region15: #{tpu_custom_call.1} parent=1 // pred_check_branch
      %41 = sbr.rel (0) target = $region17
    $region16: #{tpu_custom_call.1} parent=1 // pred_region
      %s43 = ssub.s32 128, 128
      %44 = vsyncadd [#allocation3], %s43
      %s46 = sshll.u32 [#allocation2], 4
      %s47 = int_to_ptr.vmem [resolvable:$true] %s46
      %49 = dma.vmem_to_hbm [thread:$0]  %s47, 128, %s3, [#allocation3]
    $region17: #{tpu_custom_call.1} parent=1 // pred_fallthru
      _
    // Predicated region
    $region18: #{tpu_custom_call.1} parent=1 // pred_check
      _
    $region19: #{tpu_custom_call.1} parent=1 // pred_check_branch
      %51 = sbr.rel (0) target = $region21
    $region20: #{tpu_custom_call.1} parent=1 // pred_region
      %52 = dma.done [#allocation3], 128
    $region21: #{tpu_custom_call.1} parent=1 // pred_fallthru
      _
    %53 = vsyncpa [#allocation3], 1

</llo_original>
